<compile_context>
chip_gen: v7x
topology: tpu7x:2x2x1
jax: 0.10.0
libtpu: 0.0.40
codegen_flags: <defaults>
</compile_context>

<pallas_src>
import functools

import jax
import jax.numpy as jnp
from jax import lax
from jax.experimental import pallas as pl
from jax.experimental.pallas import tpu as pltpu

LANES = 128        # lane width (last dim of the slab)
TM_MAX = 2048      # rows per block -> 2048 * 128 * 4 B = 1 MiB f32 blocks
NUM_SPLITS = 2     # leading "parallel" grid axis (both TCs on v7x)


def _wgan_partial_sum_kernel(x_ref, out_ref, *, tm, rows, half_blocks,
                             needs_mask):
    """Accumulate this core's partial sum into its (8, 128) output block."""
    c = pl.program_id(0)   # parallel split index
    i = pl.program_id(1)   # block index within the split (reduction axis)

    @pl.when(i == 0)
    def _():
        out_ref[...] = jnp.zeros_like(out_ref)

    x = x_ref[...].astype(jnp.float32)                       # (tm, 128)

    if needs_mask:
        # Mask rows past the true extent (ragged last block and/or the fully
        # duplicated clamped block of an odd split).
        blk = c * half_blocks + i                             # unclamped id
        row_ids = lax.broadcasted_iota(jnp.int32, (tm, LANES), 0) + blk * tm
        x = jnp.where(row_ids < rows, x, 0.0)

    # Sublane fold on the VPU: (tm,128) -> (tm//8, 8, 128) summed over axis 0.
    # No cross-lane (XLU) reduce inside the hot loop.
    out_ref[...] += jnp.sum(x.reshape(tm // 8, 8, LANES), axis=0)


def wasserstein_gan_loss(prediction, real=True, reduction="mean"):
    """Pallas equivalent of WassersteinGenerativeAdversarialLoss()(pred, real)."""
    # forward() always returns +/- prediction.mean(); the stored MSELoss (and
    # its reduction) never affects the forward value.
    del reduction

    n_elems = prediction.size
    assert n_elems > 0
    itemsize = prediction.dtype.itemsize

    flat = prediction.reshape(-1)

    # Lane-dense main slab (no padding copy); ragged tail handled in plain JAX.
    main = (n_elems // LANES) * LANES
    tail_sum = None
    if main < n_elems:
        tail_sum = jnp.sum(flat[main:].astype(jnp.float32))

    if main == 0:
        total = tail_sum
    else:
        x2d = flat[:main].reshape(-1, LANES)                  # [rows, 128]
        rows = x2d.shape[0]

        # Block rows: multiple of 8 (16+ for bf16 friendliness at scale),
        # never larger than the array, capped at ~1 MiB per block.
        if rows >= 8:
            tm = max(8, min(TM_MAX, (rows // 8) * 8))
        else:
            tm = rows                                         # full-dim block

        n_blocks = pl.cdiv(rows, tm)
        half = pl.cdiv(n_blocks, NUM_SPLITS)
        needs_mask = (n_blocks * tm != rows) or (NUM_SPLITS * half != n_blocks)

        def in_map(c, i):
            # Clamp so the trailing (fully masked) step of an odd split never
            # DMAs out of range.
            return (jnp.minimum(c * half + i, n_blocks - 1), 0)

        kernel = functools.partial(
            _wgan_partial_sum_kernel,
            tm=tm, rows=rows, half_blocks=half, needs_mask=needs_mask)

        partials = pl.pallas_call(
            kernel,
            out_shape=jax.ShapeDtypeStruct((NUM_SPLITS * 8, LANES),
                                           jnp.float32),
            grid_spec=pltpu.PrefetchScalarGridSpec(
                num_scalar_prefetch=0,
                grid=(NUM_SPLITS, half),
                in_specs=[pl.BlockSpec((tm, LANES), in_map)],
                out_specs=pl.BlockSpec((8, LANES), lambda c, i: (c, 0)),
            ),
            compiler_params=pltpu.CompilerParams(
                dimension_semantics=("parallel", "arbitrary"),
            ),
            cost_estimate=pl.CostEstimate(
                flops=main,
                transcendentals=0,
                bytes_accessed=main * itemsize + NUM_SPLITS * 8 * LANES * 4,
            ),
        )(x2d)

        # Single cheap cross-lane reduce of the (16, 128) partial slab.
        total = jnp.sum(partials)
        if tail_sum is not None:
            total = total + tail_sum

    sign = -1.0 if real else 1.0
    return total * (sign / float(n_elems))


if __name__ == "__main__":
    key = jax.random.PRNGKey(0)

    # Discriminator predictions for a small batch (unnormalized logits), NCHW.
    x = jax.random.normal(key, (2, 4, 16, 16), dtype=jnp.float32)

    loss_real = jax.block_until_ready(wasserstein_gan_loss(x, real=True))
    loss_fake = jax.block_until_ready(wasserstein_gan_loss(x, real=False))

    ref_real = -jnp.mean(x)
    ref_fake = jnp.mean(x)
    assert jnp.allclose(loss_real, ref_real, atol=1e-5, rtol=1e-5)
    assert jnp.allclose(loss_fake, ref_fake, atol=1e-5, rtol=1e-5)

    # Ragged shape (exercises in-kernel masking + plain-JAX tail path).
    y = jax.random.normal(jax.random.PRNGKey(1), (3, 5, 7, 11),
                          dtype=jnp.float32)
    loss_y = jax.block_until_ready(wasserstein_gan_loss(y, real=True))
    assert jnp.allclose(loss_y, -jnp.mean(y), atol=1e-5, rtol=1e-5)

    print("KERNEL_OK")
</pallas_src>

<mosaic_0001>
module attributes {stable_mosaic.version = 11 : i64} {
  func.func @_wgan_partial_sum_kernel(%arg0: i32, %arg1: i32, %arg2: memref<16x128xf32, #tpu.memory_space<vmem>>, %arg3: memref<8x128xf32, #tpu.memory_space<vmem>>) attributes {dimension_semantics = [#tpu.dimension_semantics<parallel>, #tpu.dimension_semantics<arbitrary>], iteration_bounds = array<i64: 2, 1>, scalar_prefetch = 0 : i64, scratch_operands = 0 : i64, tpu.core_type = #tpu.core_type<tc>, window_params = [{transform_indices = @transform_0, window_bounds = array<i64: 16, 128>}, {transform_indices = @transform_1, window_bounds = array<i64: 8, 128>}]} {
    %c0_i32 = arith.constant 0 : i32
    %0 = arith.cmpi eq, %arg1, %c0_i32 : i32
    %1 = arith.extui %0 : i1 to i32
    %c0_i32_0 = arith.constant 0 : i32
    %2 = arith.cmpi ne, %1, %c0_i32_0 : i32
    scf.if %2 {
      %cst_8 = arith.constant 0.000000e+00 : f32
      %19 = vector.broadcast %cst_8 : f32 to vector<8x128xf32>
      %c0_9 = arith.constant 0 : index
      %c0_10 = arith.constant 0 : index
      %20 = vector.load %arg3[%c0_9, %c0_10] : memref<8x128xf32, #tpu.memory_space<vmem>>, vector<8x128xf32>
      tpu.vector_store %arg3[%c0_9, %c0_10], %19 {strides = array<i32>} : memref<8x128xf32, #tpu.memory_space<vmem>>, vector<8x128xf32>,
    } else {
    }
    %c0 = arith.constant 0 : index
    %c0_1 = arith.constant 0 : index
    %3 = vector.load %arg2[%c0, %c0_1] : memref<16x128xf32, #tpu.memory_space<vmem>>, vector<16x128xf32>
    %c1_i32 = arith.constant 1 : i32
    %4 = arith.muli %arg0, %c1_i32 : i32
    %5 = arith.addi %4, %arg1 : i32
    %6 = tpu.iota {dimensions = array<i32: 0>} : vector<16x128xi32>
    %c16_i32 = arith.constant 16 : i32
    %7 = arith.muli %5, %c16_i32 : i32
    %8 = vector.broadcast %7 : i32 to vector<16x128xi32>
    %9 = arith.addi %6, %8 : vector<16x128xi32>
    %c16_i32_2 = arith.constant 16 : i32
    %10 = vector.broadcast %c16_i32_2 : i32 to vector<16x128xi32>
    %11 = arith.cmpi slt, %9, %10 : vector<16x128xi32>
    %cst = arith.constant 0.000000e+00 : f32
    %12 = vector.broadcast %cst : f32 to vector<16x128xf32>
    %13 = arith.select %11, %3, %12 : vector<16x128xi1>, vector<16x128xf32>
    %c0_3 = arith.constant 0 : index
    %c0_4 = arith.constant 0 : index
    %14 = vector.load %arg3[%c0_3, %c0_4] : memref<8x128xf32, #tpu.memory_space<vmem>>, vector<8x128xf32>
    %15 = vector.shape_cast %13 : vector<16x128xf32> to vector<2x8x128xf32>
    %cst_5 = arith.constant dense<0.000000e+00> : vector<8x128xf32>
    %16 = vector.multi_reduction <add>, %15, %cst_5 [0] : vector<2x8x128xf32> to vector<8x128xf32>
    %17 = arith.addf %14, %16 : vector<8x128xf32>
    %c0_6 = arith.constant 0 : index
    %c0_7 = arith.constant 0 : index
    %18 = vector.load %arg3[%c0_6, %c0_7] : memref<8x128xf32, #tpu.memory_space<vmem>>, vector<8x128xf32>
    tpu.vector_store %arg3[%c0_6, %c0_7], %17 {strides = array<i32>} : memref<8x128xf32, #tpu.memory_space<vmem>>, vector<8x128xf32>,
    return
  }
  func.func @transform_0(%arg0: i32, %arg1: i32) -> (i32, i32) {
    %c1_i32 = arith.constant 1 : i32
    %0 = arith.muli %arg0, %c1_i32 : i32
    %1 = arith.addi %0, %arg1 : i32
    %c0_i32 = arith.constant 0 : i32
    %2 = arith.minsi %1, %c0_i32 : i32
    %c0_i32_0 = arith.constant 0 : i32
    %c0_i32_1 = arith.constant 0 : i32
    return %2, %c0_i32_0 : i32, i32
  }
  func.func @transform_1(%arg0: i32, %arg1: i32) -> (i32, i32) {
    %c0_i32 = arith.constant 0 : i32
    %c0_i32_0 = arith.constant 0 : i32
    return %arg0, %c0_i32 : i32, i32
  }
}

</mosaic_0001>

<llo_original>
// kernel: tpu_custom_call.1
$region0: #{tpu_custom_call.1}
  #allocation0 [shape = 'u32[]', space=smem, size = 0x4, offset = 0x4, fixed_abs, tag = 'smem constant byte address 0x4 - core index']
  #allocation1 [shape = 'u32[144,128]{1,0:T(1,128)}', space=vmem, size = 0x12000, scoped, tag = 'internal scratch']
  %s0 = inlined_call_operand.hbm [shape: f32[16,128], index: 0, kind: input, shape index: {}]
  %s1 = inlined_call_operand.hbm [shape: f32[16,128], index: 1, kind: output, shape index: {}]
  %s2 = sld [smem:[#allocation0]]
  $region45: #{tpu_custom_call.1} parent=0
    _
  %s4 = ssub.s32 1, %s2
  %s5 = scalar_select 0, %s4, %s2
  $region1: #{tpu_custom_call.1} parent=0
    #allocation2 [shape = 'u8[16384]{0}', space=vmem, size = 0x4000, scoped, tag = 'input window, operand 0']
    #allocation3 [shape = 's32[2]{0}', space=sflag, size = 0x8, scoped, tag = 'scoped memory for tpu_custom_call.1']
    #allocation4 [shape = 's32[2]{0}', space=sflag, size = 0x8, scoped, tag = 'scoped memory for tpu_custom_call.1']
    #allocation5 [shape = 'u8[8192]{0}', space=vmem, size = 0x2000, scoped, tag = 'output window, operand 0']
    %6 = vsyncpa [#allocation3], 0
    %s7 = scalar_lea.sflag [#allocation3], 1
    %8 = vsyncpa %s7, 0
    %9 = vsyncpa [#allocation4], 0
    %s10 = scalar_lea.sflag [#allocation4], 1
    %11 = vsyncpa %s10, 0
    loop: start=0, step=1, limit=4
    $region2: #{tpu_custom_call.1} parent=1 // loop_pre_header
      _
    $region3: #{tpu_custom_call.1} parent=1 // loop_header
      %s13 = sphi 0, %s17
      %p14 = scmp.ge.s32.totalorder %s13, 4
      %s20 = sphi 0, %s32
      %s21 = sphi 0, %s28
      %s22 = sphi 0, %s20
      %s23 = sphi 0, %s21
      %s24 = sphi 0, %s22
      %s25 = sphi 0, %s23
      %s41 = sphi 0, %s43
      %s44 = sphi 0, %s41
      %s45 = sphi 0, %s44
      %s61 = sphi 0, %s45
      %s67 = sphi 0, %s69
      %s70 = sphi 0, %s67
      %s71 = sphi 0, %s70
      %s87 = sphi 0, %s71
    $region4: #{tpu_custom_call.1} parent=1 // loop_header_branch
      %16 = sbr.rel (%p14) target = $region8
    $region5: #{tpu_custom_call.1} parent=1 // loop_body
      %s18 = ssub.s32 %s13, 1
      %s19 = ssub.s32 %s13, 2
      %s26 = sadd.s32 1, %s21
      %p27 = scmp.ge.s32.totalorder %s26, 1
      %s28 = scalar_select %p27, 0, %s26
      %s29 = sadd.s32 1, %s20
      %s30 = scalar_select %p27, %s29, %s20
      %p31 = scmp.ge.s32.totalorder %s30, 2
      %s32 = scalar_select %p31, 0, %s30
      %s33 = sadd.s32 %s20, %s21
      %p34 = scmp.lt.s32.totalorder %s33, 0
      %s35 = scalar_select %p34, %s33, 0
      %s36 = sadd.s32 %s32, %s28
      %p37 = scmp.lt.s32.totalorder %s36, 0
      %s38 = scalar_select %p37, %s36, 0
      %s39 = ssub.s32 %s35, %s38
      %p40 = scmp.eq.s32.totalorder %s39, 0
      %s42 = sadd.s32 %s41, 1
      %s43 = scalar_select %p40, %s41, %s42
      %p46 = pneg %p40
      %p47 = scmp.eq.s32.totalorder %s13, 1
      %p48 = por %p46, %p47
      %p49 = scmp.ne.s32.totalorder %s41, %s44
      %p50 = scmp.eq.s32.totalorder %s13, 0
      %p51 = por %p49, %p50
      %p52 = scmp.ne.s32.totalorder %s41, %s44
      %p53 = scmp.eq.s32.totalorder %s18, 1
      %p54 = por %p52, %p53
      %p55 = scmp.ne.s32.totalorder %s44, %s45
      %p56 = scmp.eq.s32.totalorder %s18, 0
      %p57 = por %p55, %p56
      %p58 = scmp.ne.s32.totalorder %s44, %s45
      %p59 = scmp.eq.s32.totalorder %s19, 1
      %p60 = por %p58, %p59
      %p62 = scmp.ne.s32.totalorder %s45, %s61
      %p63 = scmp.eq.s32.totalorder %s19, 0
      %p64 = por %p62, %p63
      %s65 = ssub.s32 %s20, %s32
      %p66 = scmp.eq.s32.totalorder %s65, 0
      %s68 = sadd.s32 %s67, 1
      %s69 = scalar_select %p66, %s67, %s68
      %p72 = pneg %p66
      %p73 = scmp.eq.s32.totalorder %s13, 1
      %p74 = por %p72, %p73
      %p75 = scmp.ne.s32.totalorder %s67, %s70
      %p76 = scmp.eq.s32.totalorder %s13, 0
      %p77 = por %p75, %p76
      %p78 = scmp.ne.s32.totalorder %s67, %s70
      %p79 = scmp.eq.s32.totalorder %s18, 1
      %p80 = por %p78, %p79
      %p81 = scmp.ne.s32.totalorder %s70, %s71
      %p82 = scmp.eq.s32.totalorder %s18, 0
      %p83 = por %p81, %p82
      %p84 = scmp.ne.s32.totalorder %s70, %s71
      %p85 = scmp.eq.s32.totalorder %s19, 1
      %p86 = por %p84, %p85
      %p88 = scmp.ne.s32.totalorder %s71, %s87
      %p89 = scmp.eq.s32.totalorder %s19, 0
      %p90 = por %p88, %p89
      %p91 = scmp.le.s32.totalorder 1, %s13
      %p92 = scmp.lt.s32.totalorder %s13, 3
      %p93 = pnand %p91, %p92
      %p94 = pneg %p93
      // Predicated region
      $region9: #{tpu_custom_call.1} parent=5 // pred_check
        _
      $region10: #{tpu_custom_call.1} parent=5 // pred_check_branch
        %96 = sbr.rel (%p93) target = $region12
      $region11: #{tpu_custom_call.1} parent=5 // pred_region
        %s97 = ssub.s32 %s13, 1
      $region12: #{tpu_custom_call.1} parent=5 // pred_fallthru
        _
      %p98 = scmp.lt.s32.totalorder %s13, 2
      // Predicated region
      $region13: #{tpu_custom_call.1} parent=5 // pred_check
        %p99 = pneg %p98
      $region14: #{tpu_custom_call.1} parent=5 // pred_check_branch
        %101 = sbr.rel (%p99) target = $region16
      $region15: #{tpu_custom_call.1} parent=5 // pred_region
        // Predicated region
        $region17: #{tpu_custom_call.1} parent=15 // pred_check
          %p102 = pneg %p51
        $region18: #{tpu_custom_call.1} parent=15 // pred_check_branch
          %104 = sbr.rel (%p102) target = $region20
        $region19: #{tpu_custom_call.1} parent=15 // pred_region
          %s105 = sand.u32 %s41, 1
          %s106 = scalar_lea.sflag [#allocation3], %s105
          %s107 = sand.u32 %s41, 1
          %s108 = smul.addr %s107, 16
          %s109 = scalar_lea.vmem [#allocation2], %s108
          %s110 = sadd.s32 %s20, %s21
          %p111 = scmp.lt.s32.totalorder %s110, 0
          %s112 = scalar_select %p111, %s110, 0
          %s113 = smul.u32 2, %s112
          %s115 = ssub.s32 256, 256
          %116 = vsyncadd %s106, %s115
          %s117 = smul.addr %s113, 128
          %s118 = scalar_lea.hbm %s0, %s117
          %s119 = sshll.u32 %s109, 4
          %s120 = int_to_ptr.vmem [resolvable:$true] %s119
          %125 = dma.hbm_to_vmem [thread:$0]  %s118, 256, %s120, %s106, 128, 128, 8
        $region20: #{tpu_custom_call.1} parent=15 // pred_fallthru
          _
      $region16: #{tpu_custom_call.1} parent=5 // pred_fallthru
        _
      %p126 = scmp.le.s32.totalorder 1, %s13
      %p127 = scmp.lt.s32.totalorder %s13, 3
      %p128 = pnand %p126, %p127
      %p129 = pneg %p128
      // Predicated region
      $region21: #{tpu_custom_call.1} parent=5 // pred_check
        _
      $region22: #{tpu_custom_call.1} parent=5 // pred_check_branch
        %131 = sbr.rel (%p128) target = $region24
      $region23: #{tpu_custom_call.1} parent=5 // pred_region
        %s132 = ssub.s32 %s13, 1
        %s133 = sand.u32 %s44, 1
        %s134 = scalar_lea.sflag [#allocation3], %s133
        %s135 = sand.u32 %s44, 1
        %s136 = smul.addr %s135, 16
        %s137 = scalar_lea.vmem [#allocation2], %s136
        // Predicated region
        $region25: #{tpu_custom_call.1} parent=23 // pred_check
          %p138 = pneg %p57
        $region26: #{tpu_custom_call.1} parent=23 // pred_check_branch
          %140 = sbr.rel (%p138) target = $region28
        $region27: #{tpu_custom_call.1} parent=23 // pred_region
          %141 = dma.done %s134, 256
        $region28: #{tpu_custom_call.1} parent=23 // pred_fallthru
          _
        %s142 = sand.u32 %s44, 1
        %s143 = scalar_lea.sflag [#allocation3], %s142
        %s144 = sand.u32 %s44, 1
        %s145 = smul.addr %s144, 16
        %s146 = scalar_lea.vmem [#allocation2], %s145
        %p147 = pneg %p57
        %p148 = pneg %p54
        %p149 = pneg %p83
        %p150 = pneg %p80
        %s151 = sand.u32 %s70, 1
        %s152 = scalar_lea.sflag [#allocation4], %s151
        %s153 = sand.u32 %s70, 1
        %s154 = smul.addr %s153, 8
        %s155 = scalar_lea.vmem [#allocation5], %s154
        %s156 = sadd.s32 %s22, %s23
        %p157 = scmp.lt.s32.totalorder %s156, 0
        %s158 = scalar_select %p157, %s156, 0
        %s159 = smul.u32 2, %s158
        %p160 = scmp.eq.s32.totalorder %s23, 0
        // Predicated region
        $region29: #{tpu_custom_call.1} parent=23 // pred_check
          %p161 = pneg %p160
        $region30: #{tpu_custom_call.1} parent=23 // pred_check_branch
          %163 = sbr.rel (%p161) target = $region32
        $region31: #{tpu_custom_call.1} parent=23 // pred_region
          %164 = vst [vmem:[%s155] sm:$0xff] 0.0
        $region32: #{tpu_custom_call.1} parent=23 // pred_fallthru
          _
        %v165 = vld [vmem:[%s137] sm:$0xff]
        %v166 = vld [vmem:[%s137 + $0x8] sm:$0xff]
        %s167 = sadd.s32 %s22, %s23
        %v168 = vlaneseq
        %v169 = vshrl.u32 %v168, 7
        %v170 = vadd.s32 %v169, 8
        %s171 = smul.u32 %s167, 16
        %v172 = vstv %s171
        %v173 = vadd.s32 %v169, %v172
        %v174 = vadd.s32 %v170, %v172
        %vm175 = vcmp.lt.s32.totalorder %v173, 16
        %vm176 = vcmp.lt.s32.totalorder %v174, 16
        %v177 = vsel %vm175, %v165, 0.0
        %v178 = vsel %vm176, %v166, 0.0
        %v179 = vld [vmem:[%s155] sm:$0xff]
        %v180 = vadd.f32 %v177, %v178
        %v181 = vadd.f32 %v179, %v180
        %182 = vst [vmem:[%s155] sm:$0xff] %v181
        %s183 = sand.u32 %s70, 1
        %s184 = scalar_lea.sflag [#allocation4], %s183
        %s185 = sand.u32 %s70, 1
        %s186 = smul.addr %s185, 8
        %s187 = scalar_lea.vmem [#allocation5], %s186
        // Predicated region
        $region33: #{tpu_custom_call.1} parent=23 // pred_check
          %p188 = pneg %p80
        $region34: #{tpu_custom_call.1} parent=23 // pred_check_branch
          %190 = sbr.rel (%p188) target = $region36
        $region35: #{tpu_custom_call.1} parent=23 // pred_region
          %s192 = ssub.s32 128, 128
          %193 = vsyncadd %s184, %s192
          %s194 = smul.addr %s22, 128
          %s195 = scalar_lea.hbm %s1, %s194
          %s197 = sshll.u32 %s187, 4
          %s198 = int_to_ptr.vmem [resolvable:$true] %s197
          %200 = dma.vmem_to_hbm [thread:$0]  %s198, 128, %s195, %s184
        $region36: #{tpu_custom_call.1} parent=23 // pred_fallthru
          _
      $region24: #{tpu_custom_call.1} parent=5 // pred_fallthru
        _
      %p201 = scmp.le.s32.totalorder 2, %s13
      // Predicated region
      $region37: #{tpu_custom_call.1} parent=5 // pred_check
        %p202 = pneg %p201
      $region38: #{tpu_custom_call.1} parent=5 // pred_check_branch
        %204 = sbr.rel (%p202) target = $region40
      $region39: #{tpu_custom_call.1} parent=5 // pred_region
        %s205 = ssub.s32 %s13, 2
        // Predicated region
        $region41: #{tpu_custom_call.1} parent=39 // pred_check
          %p206 = pneg %p86
        $region42: #{tpu_custom_call.1} parent=39 // pred_check_branch
          %208 = sbr.rel (%p206) target = $region44
        $region43: #{tpu_custom_call.1} parent=39 // pred_region
          %s209 = sand.u32 %s71, 1
          %s210 = scalar_lea.sflag [#allocation4], %s209
          %s211 = sand.u32 %s71, 1
          %s212 = smul.addr %s211, 8
          %s213 = scalar_lea.vmem [#allocation5], %s212
          %214 = dma.done %s210, 128
        $region44: #{tpu_custom_call.1} parent=39 // pred_fallthru
          _
      $region40: #{tpu_custom_call.1} parent=5 // pred_fallthru
        _
    $region6: #{tpu_custom_call.1} parent=1 // loop_footer
      %s17 = sadd.s32 1, %s13
    $region7: #{tpu_custom_call.1} parent=1 // loop_footer_branch
      %12 = sbr.rel target = $region3
    $region8: #{tpu_custom_call.1} parent=1 // loop_exit
      _
    %215 = vsyncpa [#allocation3], 1
    %s216 = scalar_lea.sflag [#allocation3], 1
    %217 = vsyncpa %s216, 1
    %218 = vsyncpa [#allocation4], 1
    %s219 = scalar_lea.sflag [#allocation4], 1
    %220 = vsyncpa %s219, 1

</llo_original>
